<compile_context>
chip_gen: v7x
topology: tpu7x:2x2x1
jax: 0.10.0
libtpu: 0.0.40
codegen_flags: <defaults>
</compile_context>

<pallas_src>
import jax
import jax.numpy as jnp
from jax import lax
from jax.experimental import pallas as pl
from jax.experimental.pallas import tpu as pltpu


def _fused_kernel(x_ref, s_ref, m1_ref, m2_ref, b_ref, o_ref):
    """conv1+bn1+relu -> conv2+bn2+relu -> +residual -> relu, whole batch."""
    n, h, wc = x_ref.shape
    r = n * h

    x = x_ref[...].reshape(r, wc)            # (N*H, W*C) f32, lane-dense
    biases = b_ref[...]                      # (2, W*C) f32

    def conv_bn_relu(inp_f32, m_ref, bias_row):
        inp_bf = inp_f32.astype(jnp.bfloat16)
        acc = jnp.zeros((r, wc), jnp.float32)
        for ky in range(3):                  # 3 row taps, unrolled at trace time
            if ky == 1:
                shifted = inp_bf             # dy = 0 -> identity shift, no matmul
            else:
                # 0/1 shift matrix selects row h+ky-1 of the same image,
                # zero rows at the image border (H-direction padding=1).
                shifted = jnp.dot(
                    s_ref[ky], inp_bf,
                    preferred_element_type=jnp.float32).astype(jnp.bfloat16)
            # Banded matrix carries (kx, Cin)->Cout taps + folded BN scale.
            acc = acc + jnp.dot(shifted, m_ref[ky],
                                preferred_element_type=jnp.float32)
        return jnp.maximum(acc + bias_row, 0.0)

    y1 = conv_bn_relu(x, m1_ref, biases[0:1, :])
    y2 = conv_bn_relu(y1, m2_ref, biases[1:2, :])
    out = jnp.maximum(x + y2, 0.0)           # residual add + relu, f32
    o_ref[...] = out.reshape(n, h, wc).astype(o_ref.dtype)


def _build_row_tap_matrices(w_oihw, scale, W):
    """(Cout, Cin, 3, 3) torch weights + folded BN scale -> (3, W*Cin, W*Cout) bf16.

    M[ky][w_in*C + ci, w_out*C + co] = scale[co] * w[co, ci, ky, kx]
    with w_in = w_out + kx - 1; entries outside the band are zero, which
    implements the W-direction "padding=1" automatically.
    """
    mats = []
    for ky in range(3):
        m = None
        for kx in range(3):
            blk = (w_oihw[:, :, ky, kx] * scale[:, None]).T        # (Cin, Cout), scaled
            band = jnp.eye(W, k=1 - kx, dtype=jnp.float32)         # w_in = w_out + kx - 1
            term = jnp.kron(band, blk)
            m = term if m is None else m + term
        mats.append(m)
    return jnp.stack(mats).astype(jnp.bfloat16)                    # (3, W*C, W*C)


def _build_row_shift_matrices(N, H):
    """(3, N*H, N*H) 0/1 matrices: S[ky] @ X selects row h + (ky-1) of the same
    image; rows that fall outside the image are zero (H-direction padding=1)."""
    mats = [jnp.kron(jnp.eye(N, dtype=jnp.float32),
                     jnp.eye(H, k=dy, dtype=jnp.float32))
            for dy in (-1, 0, 1)]
    return jnp.stack(mats).astype(jnp.bfloat16)


def transpose_up_add_forward(x_nhwc, w1_oihw, w2_oihw, scale1, bias1, scale2, bias2):
    """x_nhwc: (N, H, W, C) f32.  w*: PyTorch-layout (C, C, 3, 3).  scale/bias: (C,).

    Designed for small W*C (here 16*8 = 128 = one lane tile); for larger W*C the
    lane axis would need tiling with a grid.
    """
    N, H, W, C = x_nhwc.shape
    WC = W * C

    x3 = x_nhwc.reshape(N, H, WC)                                  # lane-dense
    m1 = _build_row_tap_matrices(w1_oihw, scale1, W)
    m2 = _build_row_tap_matrices(w2_oihw, scale2, W)
    s = _build_row_shift_matrices(N, H)
    b = jnp.stack([jnp.tile(bias1, W), jnp.tile(bias2, W)]).astype(jnp.float32)

    vmem = pltpu.MemorySpace.VMEM
    out3 = pl.pallas_call(
        _fused_kernel,
        out_shape=jax.ShapeDtypeStruct((N, H, WC), x_nhwc.dtype),
        in_specs=[pl.BlockSpec(memory_space=vmem)] * 5,
        out_specs=pl.BlockSpec(memory_space=vmem),
        compiler_params=pltpu.CompilerParams(vmem_limit_bytes=16 * 1024 * 1024),
    )(x3, s, m1, m2, b)
    return out3.reshape(N, H, W, C)


def _reference(x_nhwc, w1_oihw, w2_oihw, s1, b1, s2, b2):
    """Pure-JAX f32 reference (NHWC conv via lax) for verification."""
    dn = ('NHWC', 'HWIO', 'NHWC')
    w1 = jnp.transpose(w1_oihw, (2, 3, 1, 0))
    w2 = jnp.transpose(w2_oihw, (2, 3, 1, 0))
    y = lax.conv_general_dilated(x_nhwc, w1, (1, 1), 'SAME', dimension_numbers=dn)
    y = jnp.maximum(y * s1 + b1, 0.0)
    y = lax.conv_general_dilated(y, w2, (1, 1), 'SAME', dimension_numbers=dn)
    y = jnp.maximum(y * s2 + b2, 0.0)
    return jnp.maximum(x_nhwc + y, 0.0)


if __name__ == "__main__":
    key = jax.random.PRNGKey(0)
    N, C, H, W = 2, 8, 16, 16          # inplanes = 8; W*C = 128 = one lane tile

    k_x, k_w1, k_w2, k_g1, k_g2, k_b1, k_b2 = jax.random.split(key, 7)

    # Input in PyTorch NCHW, converted to NHWC for the kernel.
    x_nchw = jax.random.normal(k_x, (N, C, H, W), jnp.float32)
    x_nhwc = jnp.transpose(x_nchw, (0, 2, 3, 1))

    # Conv weights, PyTorch layout (Cout, Cin, 3, 3).
    w1_oihw = jax.random.normal(k_w1, (C, C, 3, 3), jnp.float32) * 0.1
    w2_oihw = jax.random.normal(k_w2, (C, C, 3, 3), jnp.float32) * 0.1

    # BatchNorm (eval mode) folded to per-channel scale/bias.
    eps = 1e-5
    gamma1 = 1.0 + 0.1 * jax.random.normal(k_g1, (C,), jnp.float32)
    gamma2 = 1.0 + 0.1 * jax.random.normal(k_g2, (C,), jnp.float32)
    beta1 = 0.1 * jax.random.normal(k_b1, (C,), jnp.float32)
    beta2 = 0.1 * jax.random.normal(k_b2, (C,), jnp.float32)
    run_mean = jnp.zeros((C,), jnp.float32)
    run_var = jnp.ones((C,), jnp.float32)
    scale1 = gamma1 / jnp.sqrt(run_var + eps)
    bias1 = beta1 - run_mean * scale1
    scale2 = gamma2 / jnp.sqrt(run_var + eps)
    bias2 = beta2 - run_mean * scale2

    out = transpose_up_add_forward(x_nhwc, w1_oihw, w2_oihw,
                                   scale1, bias1, scale2, bias2)
    out = jax.block_until_ready(out)

    ref = _reference(x_nhwc, w1_oihw, w2_oihw, scale1, bias1, scale2, bias2)
    assert out.shape == (N, H, W, C)
    # bf16 MXU operands (f32 accumulation) -> tolerance looser than pure f32.
    assert jnp.allclose(out, ref, rtol=2e-2, atol=2e-2), "mismatch vs reference"

    # Back to PyTorch NCHW convention if a caller needs it.
    out_nchw = jnp.transpose(out, (0, 3, 1, 2))
    jax.block_until_ready(out_nchw)

    print("KERNEL_OK")
</pallas_src>

<mosaic_0001>
module attributes {stable_mosaic.version = 11 : i64} {
  func.func @_fused_kernel(%arg0: memref<2x16x128xf32, #tpu.memory_space<vmem>>, %arg1: memref<3x32x32xbf16, #tpu.memory_space<vmem>>, %arg2: memref<3x128x128xbf16, #tpu.memory_space<vmem>>, %arg3: memref<3x128x128xbf16, #tpu.memory_space<vmem>>, %arg4: memref<2x128xf32, #tpu.memory_space<vmem>>, %arg5: memref<2x16x128xf32, #tpu.memory_space<vmem>>) attributes {dimension_semantics = [], scalar_prefetch = 0 : i64, scratch_operands = 0 : i64, tpu.core_type = #tpu.core_type<tc>} {
    %c0 = arith.constant 0 : index
    %c0_0 = arith.constant 0 : index
    %c0_1 = arith.constant 0 : index
    %0 = vector.load %arg0[%c0, %c0_0, %c0_1] : memref<2x16x128xf32, #tpu.memory_space<vmem>>, vector<2x16x128xf32>
    %1 = vector.shape_cast %0 : vector<2x16x128xf32> to vector<32x128xf32>
    %c0_2 = arith.constant 0 : index
    %c0_3 = arith.constant 0 : index
    %2 = vector.load %arg4[%c0_2, %c0_3] : memref<2x128xf32, #tpu.memory_space<vmem>>, vector<2x128xf32>
    %3 = vector.extract_strided_slice %2 {offsets = [0, 0], sizes = [1, 128], strides = [1, 1]} : vector<2x128xf32> to vector<1x128xf32>
    %4 = arith.truncf %1 : vector<32x128xf32> to vector<32x128xbf16>
    %cst = arith.constant 0.000000e+00 : f32
    %5 = vector.broadcast %cst : f32 to vector<32x128xf32>
    %c0_4 = arith.constant 0 : index
    %c0_5 = arith.constant 0 : index
    %c0_6 = arith.constant 0 : index
    %6 = vector.load %arg1[%c0_4, %c0_5, %c0_6] : memref<3x32x32xbf16, #tpu.memory_space<vmem>>, vector<1x32x32xbf16>
    %7 = vector.shape_cast %6 : vector<1x32x32xbf16> to vector<32x32xbf16>
    %cst_7 = arith.constant dense<0.000000e+00> : vector<32x128xf32>
    %8 = tpu.matmul %7, %4, %cst_7 {dimension_numbers = #tpu.dot_dimension_numbers<[1], [0], [0], [1], [0, 0, 1, 1], [], []>} : vector<32x32xbf16>, vector<32x128xbf16>, vector<32x128xf32> -> vector<32x128xf32>
    %9 = arith.truncf %8 : vector<32x128xf32> to vector<32x128xbf16>
    %c0_8 = arith.constant 0 : index
    %c0_9 = arith.constant 0 : index
    %c0_10 = arith.constant 0 : index
    %10 = vector.load %arg2[%c0_8, %c0_9, %c0_10] : memref<3x128x128xbf16, #tpu.memory_space<vmem>>, vector<1x128x128xbf16>
    %11 = vector.shape_cast %10 : vector<1x128x128xbf16> to vector<128x128xbf16>
    %cst_11 = arith.constant dense<0.000000e+00> : vector<32x128xf32>
    %12 = tpu.matmul %9, %11, %cst_11 {dimension_numbers = #tpu.dot_dimension_numbers<[1], [0], [0], [1], [0, 0, 1, 1], [], []>} : vector<32x128xbf16>, vector<128x128xbf16>, vector<32x128xf32> -> vector<32x128xf32>
    %13 = arith.addf %5, %12 : vector<32x128xf32>
    %c1 = arith.constant 1 : index
    %c0_12 = arith.constant 0 : index
    %c0_13 = arith.constant 0 : index
    %14 = vector.load %arg2[%c1, %c0_12, %c0_13] : memref<3x128x128xbf16, #tpu.memory_space<vmem>>, vector<1x128x128xbf16>
    %15 = vector.shape_cast %14 : vector<1x128x128xbf16> to vector<128x128xbf16>
    %cst_14 = arith.constant dense<0.000000e+00> : vector<32x128xf32>
    %16 = tpu.matmul %4, %15, %cst_14 {dimension_numbers = #tpu.dot_dimension_numbers<[1], [0], [0], [1], [0, 0, 1, 1], [], []>} : vector<32x128xbf16>, vector<128x128xbf16>, vector<32x128xf32> -> vector<32x128xf32>
    %17 = arith.addf %13, %16 : vector<32x128xf32>
    %c2 = arith.constant 2 : index
    %c0_15 = arith.constant 0 : index
    %c0_16 = arith.constant 0 : index
    %18 = vector.load %arg1[%c2, %c0_15, %c0_16] : memref<3x32x32xbf16, #tpu.memory_space<vmem>>, vector<1x32x32xbf16>
    %19 = vector.shape_cast %18 : vector<1x32x32xbf16> to vector<32x32xbf16>
    %cst_17 = arith.constant dense<0.000000e+00> : vector<32x128xf32>
    %20 = tpu.matmul %19, %4, %cst_17 {dimension_numbers = #tpu.dot_dimension_numbers<[1], [0], [0], [1], [0, 0, 1, 1], [], []>} : vector<32x32xbf16>, vector<32x128xbf16>, vector<32x128xf32> -> vector<32x128xf32>
    %21 = arith.truncf %20 : vector<32x128xf32> to vector<32x128xbf16>
    %c2_18 = arith.constant 2 : index
    %c0_19 = arith.constant 0 : index
    %c0_20 = arith.constant 0 : index
    %22 = vector.load %arg2[%c2_18, %c0_19, %c0_20] : memref<3x128x128xbf16, #tpu.memory_space<vmem>>, vector<1x128x128xbf16>
    %23 = vector.shape_cast %22 : vector<1x128x128xbf16> to vector<128x128xbf16>
    %cst_21 = arith.constant dense<0.000000e+00> : vector<32x128xf32>
    %24 = tpu.matmul %21, %23, %cst_21 {dimension_numbers = #tpu.dot_dimension_numbers<[1], [0], [0], [1], [0, 0, 1, 1], [], []>} : vector<32x128xbf16>, vector<128x128xbf16>, vector<32x128xf32> -> vector<32x128xf32>
    %25 = arith.addf %17, %24 : vector<32x128xf32>
    %26 = vector.broadcast %3 : vector<1x128xf32> to vector<32x128xf32>
    %27 = arith.addf %25, %26 : vector<32x128xf32>
    %cst_22 = arith.constant 0.000000e+00 : f32
    %28 = vector.broadcast %cst_22 : f32 to vector<32x128xf32>
    %29 = arith.maximumf %27, %28 : vector<32x128xf32>
    %30 = vector.extract_strided_slice %2 {offsets = [1, 0], sizes = [1, 128], strides = [1, 1]} : vector<2x128xf32> to vector<1x128xf32>
    %31 = arith.truncf %29 : vector<32x128xf32> to vector<32x128xbf16>
    %cst_23 = arith.constant 0.000000e+00 : f32
    %32 = vector.broadcast %cst_23 : f32 to vector<32x128xf32>
    %c0_24 = arith.constant 0 : index
    %c0_25 = arith.constant 0 : index
    %c0_26 = arith.constant 0 : index
    %33 = vector.load %arg1[%c0_24, %c0_25, %c0_26] : memref<3x32x32xbf16, #tpu.memory_space<vmem>>, vector<1x32x32xbf16>
    %34 = vector.shape_cast %33 : vector<1x32x32xbf16> to vector<32x32xbf16>
    %cst_27 = arith.constant dense<0.000000e+00> : vector<32x128xf32>
    %35 = tpu.matmul %34, %31, %cst_27 {dimension_numbers = #tpu.dot_dimension_numbers<[1], [0], [0], [1], [0, 0, 1, 1], [], []>} : vector<32x32xbf16>, vector<32x128xbf16>, vector<32x128xf32> -> vector<32x128xf32>
    %36 = arith.truncf %35 : vector<32x128xf32> to vector<32x128xbf16>
    %c0_28 = arith.constant 0 : index
    %c0_29 = arith.constant 0 : index
    %c0_30 = arith.constant 0 : index
    %37 = vector.load %arg3[%c0_28, %c0_29, %c0_30] : memref<3x128x128xbf16, #tpu.memory_space<vmem>>, vector<1x128x128xbf16>
    %38 = vector.shape_cast %37 : vector<1x128x128xbf16> to vector<128x128xbf16>
    %cst_31 = arith.constant dense<0.000000e+00> : vector<32x128xf32>
    %39 = tpu.matmul %36, %38, %cst_31 {dimension_numbers = #tpu.dot_dimension_numbers<[1], [0], [0], [1], [0, 0, 1, 1], [], []>} : vector<32x128xbf16>, vector<128x128xbf16>, vector<32x128xf32> -> vector<32x128xf32>
    %40 = arith.addf %32, %39 : vector<32x128xf32>
    %c1_32 = arith.constant 1 : index
    %c0_33 = arith.constant 0 : index
    %c0_34 = arith.constant 0 : index
    %41 = vector.load %arg3[%c1_32, %c0_33, %c0_34] : memref<3x128x128xbf16, #tpu.memory_space<vmem>>, vector<1x128x128xbf16>
    %42 = vector.shape_cast %41 : vector<1x128x128xbf16> to vector<128x128xbf16>
    %cst_35 = arith.constant dense<0.000000e+00> : vector<32x128xf32>
    %43 = tpu.matmul %31, %42, %cst_35 {dimension_numbers = #tpu.dot_dimension_numbers<[1], [0], [0], [1], [0, 0, 1, 1], [], []>} : vector<32x128xbf16>, vector<128x128xbf16>, vector<32x128xf32> -> vector<32x128xf32>
    %44 = arith.addf %40, %43 : vector<32x128xf32>
    %c2_36 = arith.constant 2 : index
    %c0_37 = arith.constant 0 : index
    %c0_38 = arith.constant 0 : index
    %45 = vector.load %arg1[%c2_36, %c0_37, %c0_38] : memref<3x32x32xbf16, #tpu.memory_space<vmem>>, vector<1x32x32xbf16>
    %46 = vector.shape_cast %45 : vector<1x32x32xbf16> to vector<32x32xbf16>
    %cst_39 = arith.constant dense<0.000000e+00> : vector<32x128xf32>
    %47 = tpu.matmul %46, %31, %cst_39 {dimension_numbers = #tpu.dot_dimension_numbers<[1], [0], [0], [1], [0, 0, 1, 1], [], []>} : vector<32x32xbf16>, vector<32x128xbf16>, vector<32x128xf32> -> vector<32x128xf32>
    %48 = arith.truncf %47 : vector<32x128xf32> to vector<32x128xbf16>
    %c2_40 = arith.constant 2 : index
    %c0_41 = arith.constant 0 : index
    %c0_42 = arith.constant 0 : index
    %49 = vector.load %arg3[%c2_40, %c0_41, %c0_42] : memref<3x128x128xbf16, #tpu.memory_space<vmem>>, vector<1x128x128xbf16>
    %50 = vector.shape_cast %49 : vector<1x128x128xbf16> to vector<128x128xbf16>
    %cst_43 = arith.constant dense<0.000000e+00> : vector<32x128xf32>
    %51 = tpu.matmul %48, %50, %cst_43 {dimension_numbers = #tpu.dot_dimension_numbers<[1], [0], [0], [1], [0, 0, 1, 1], [], []>} : vector<32x128xbf16>, vector<128x128xbf16>, vector<32x128xf32> -> vector<32x128xf32>
    %52 = arith.addf %44, %51 : vector<32x128xf32>
    %53 = vector.broadcast %30 : vector<1x128xf32> to vector<32x128xf32>
    %54 = arith.addf %52, %53 : vector<32x128xf32>
    %cst_44 = arith.constant 0.000000e+00 : f32
    %55 = vector.broadcast %cst_44 : f32 to vector<32x128xf32>
    %56 = arith.maximumf %54, %55 : vector<32x128xf32>
    %57 = arith.addf %1, %56 : vector<32x128xf32>
    %cst_45 = arith.constant 0.000000e+00 : f32
    %58 = vector.broadcast %cst_45 : f32 to vector<32x128xf32>
    %59 = arith.maximumf %57, %58 : vector<32x128xf32>
    %60 = vector.shape_cast %59 : vector<32x128xf32> to vector<2x16x128xf32>
    %c0_46 = arith.constant 0 : index
    %c0_47 = arith.constant 0 : index
    %c0_48 = arith.constant 0 : index
    %61 = vector.load %arg5[%c0_46, %c0_47, %c0_48] : memref<2x16x128xf32, #tpu.memory_space<vmem>>, vector<2x16x128xf32>
    tpu.vector_store %arg5[%c0_46, %c0_47, %c0_48], %60 {strides = array<i32>} : memref<2x16x128xf32, #tpu.memory_space<vmem>>, vector<2x16x128xf32>,
    return
  }
}

</mosaic_0001>

<llo_original>
// kernel: tpu_custom_call.1
$region0: #{tpu_custom_call.1}
  #allocation0 [shape = 'u32[]', space=smem, size = 0x4, offset = 0x4, fixed_abs, tag = 'smem constant byte address 0x4 - core index']
  #allocation1 [shape = 'u32[144,128]{1,0:T(1,128)}', space=vmem, size = 0x12000, scoped, tag = 'internal scratch']
  %s0 = inlined_call_operand.hbm [shape: f32[2,16,128], index: 0, kind: input, shape index: {}]
  %s1 = inlined_call_operand.hbm [shape: bf16[3,32,32], index: 1, kind: input, shape index: {}]
  %s2 = inlined_call_operand.hbm [shape: bf16[3,128,128], index: 2, kind: input, shape index: {}]
  %s3 = inlined_call_operand.hbm [shape: bf16[3,128,128], index: 3, kind: input, shape index: {}]
  %s4 = inlined_call_operand.vmem [shape: f32[2,128], index: 4, kind: input, shape index: {}]
  %s5 = inlined_call_operand.hbm [shape: f32[2,16,128], index: 5, kind: output, shape index: {}]
  %s6 = sld [smem:[#allocation0]]
  $region46: #{tpu_custom_call.1} parent=0
    _
  %s8 = ssub.s32 1, %s6
  %s9 = scalar_select 0, %s8, %s6
  $region1: #{tpu_custom_call.1} parent=0
    #allocation2 [shape = 'u8[16384]{0}', space=vmem, size = 0x4000, scoped, tag = 'input window, operand 0, single buffered']
    #allocation3 [shape = 's32[1]{0}', space=sflag, size = 0x4, scoped, tag = 'scoped memory for tpu_custom_call.1']
    #allocation4 [shape = 's32[1]{0}', space=sflag, size = 0x4, scoped, tag = 'scoped memory for tpu_custom_call.1']
    #allocation5 [shape = 'u8[24576]{0}', space=vmem, size = 0x6000, scoped, tag = 'input window, operand 1, single buffered']
    #allocation6 [shape = 's32[1]{0}', space=sflag, size = 0x4, scoped, tag = 'scoped memory for tpu_custom_call.1']
    #allocation7 [shape = 'u8[98304]{0}', space=vmem, size = 0x18000, scoped, tag = 'input window, operand 2, single buffered']
    #allocation8 [shape = 'u8[98304]{0}', space=vmem, size = 0x18000, scoped, tag = 'input window, operand 3, single buffered']
    #allocation9 [shape = 's32[1]{0}', space=sflag, size = 0x4, scoped, tag = 'scoped memory for tpu_custom_call.1']
    #allocation10 [shape = 'u8[16384]{0}', space=vmem, size = 0x4000, scoped, tag = 'output window, operand 0, single buffered']
    %10 = vsyncpa [#allocation3], 0
    %11 = vsyncpa [#allocation6], 0
    %12 = vsyncpa [#allocation9], 0
    %13 = vsyncpa [#allocation4], 0
    // Predicated region
    $region2: #{tpu_custom_call.1} parent=1 // pred_check
      _
    $region3: #{tpu_custom_call.1} parent=1 // pred_check_branch
      %15 = sbr.rel (0) target = $region5
    $region4: #{tpu_custom_call.1} parent=1 // pred_region
      %s17 = ssub.s32 512, 512
      %18 = vsyncadd [#allocation3], %s17
      %s19 = sshll.u32 [#allocation2], 4
      %s20 = int_to_ptr.vmem [resolvable:$true] %s19
      %25 = dma.hbm_to_vmem [thread:$0]  %s0, 512, %s20, [#allocation3], 128, 128, 8
    $region5: #{tpu_custom_call.1} parent=1 // pred_fallthru
      _
    // Predicated region
    $region6: #{tpu_custom_call.1} parent=1 // pred_check
      _
    $region7: #{tpu_custom_call.1} parent=1 // pred_check_branch
      %27 = sbr.rel (0) target = $region9
    $region8: #{tpu_custom_call.1} parent=1 // pred_region
      %s29 = ssub.s32 768, 768
      %30 = vsyncadd [#allocation6], %s29
      %s31 = sshll.u32 [#allocation5], 4
      %s32 = int_to_ptr.vmem [resolvable:$true] %s31
      %37 = dma.hbm_to_vmem [thread:$0]  %s1, 768, %s32, [#allocation6], 64, 64, 4
    $region9: #{tpu_custom_call.1} parent=1 // pred_fallthru
      _
    // Predicated region
    $region10: #{tpu_custom_call.1} parent=1 // pred_check
      _
    $region11: #{tpu_custom_call.1} parent=1 // pred_check_branch
      %39 = sbr.rel (0) target = $region13
    $region12: #{tpu_custom_call.1} parent=1 // pred_region
      %s41 = ssub.s32 3072, 3072
      %42 = vsyncadd [#allocation6], %s41
      %s43 = sshll.u32 [#allocation7], 4
      %s44 = int_to_ptr.vmem [resolvable:$true] %s43
      %49 = dma.hbm_to_vmem [thread:$0]  %s2, 3072, %s44, [#allocation6], 64, 64, 4
    $region13: #{tpu_custom_call.1} parent=1 // pred_fallthru
      _
    // Predicated region
    $region14: #{tpu_custom_call.1} parent=1 // pred_check
      _
    $region15: #{tpu_custom_call.1} parent=1 // pred_check_branch
      %51 = sbr.rel (0) target = $region17
    $region16: #{tpu_custom_call.1} parent=1 // pred_region
      %s53 = ssub.s32 3072, 3072
      %54 = vsyncadd [#allocation9], %s53
      %s55 = sshll.u32 [#allocation8], 4
      %s56 = int_to_ptr.vmem [resolvable:$true] %s55
      %61 = dma.hbm_to_vmem [thread:$0]  %s3, 3072, %s56, [#allocation9], 64, 64, 4
    $region17: #{tpu_custom_call.1} parent=1 // pred_fallthru
      _
    // Predicated region
    $region18: #{tpu_custom_call.1} parent=1 // pred_check
      _
    $region19: #{tpu_custom_call.1} parent=1 // pred_check_branch
      %63 = sbr.rel (0) target = $region21
    $region20: #{tpu_custom_call.1} parent=1 // pred_region
      _
    $region21: #{tpu_custom_call.1} parent=1 // pred_fallthru
      _
    // Predicated region
    $region22: #{tpu_custom_call.1} parent=1 // pred_check
      _
    $region23: #{tpu_custom_call.1} parent=1 // pred_check_branch
      %65 = sbr.rel (0) target = $region25
    $region24: #{tpu_custom_call.1} parent=1 // pred_region
      %66 = dma.done [#allocation3], 512
    $region25: #{tpu_custom_call.1} parent=1 // pred_fallthru
      _
    // Predicated region
    $region26: #{tpu_custom_call.1} parent=1 // pred_check
      _
    $region27: #{tpu_custom_call.1} parent=1 // pred_check_branch
      %68 = sbr.rel (0) target = $region29
    $region28: #{tpu_custom_call.1} parent=1 // pred_region
      %69 = dma.done [#allocation6], 768
    $region29: #{tpu_custom_call.1} parent=1 // pred_fallthru
      _
    // Predicated region
    $region30: #{tpu_custom_call.1} parent=1 // pred_check
      _
    $region31: #{tpu_custom_call.1} parent=1 // pred_check_branch
      %71 = sbr.rel (0) target = $region33
    $region32: #{tpu_custom_call.1} parent=1 // pred_region
      %72 = dma.done [#allocation6], 3072
    $region33: #{tpu_custom_call.1} parent=1 // pred_fallthru
      _
    // Predicated region
    $region34: #{tpu_custom_call.1} parent=1 // pred_check
      _
    $region35: #{tpu_custom_call.1} parent=1 // pred_check_branch
      %74 = sbr.rel (0) target = $region37
    $region36: #{tpu_custom_call.1} parent=1 // pred_region
      %75 = dma.done [#allocation9], 3072
    $region37: #{tpu_custom_call.1} parent=1 // pred_fallthru
      _
    %v77 = vld [vmem:[#allocation2] sm:$0xff]
    %v78 = vld [vmem:[#allocation2 + $0x8] sm:$0xff]
    %v79 = vld [vmem:[#allocation2 + $0x10] sm:$0xff]
    %v80 = vld [vmem:[#allocation2 + $0x18] sm:$0xff]
    %v81 = vld [vmem:[%s4] sm:$0x3]
    %v82 = vpack.c.bf16 %v78, %v77
    %v83 = vpack.c.bf16 %v80, %v79
    %v84 = vld [vmem:[#allocation5] sm:$0xf]
    %v85 = vld [vmem:[#allocation5 + $0x4] sm:$0xf]
    %v86 = vld [vmem:[#allocation5 + $0x8] sm:$0xf]
    %v87 = vld [vmem:[#allocation5 + $0xc] sm:$0xf]
    %v92 = vunpack.c.l.b16 %v84
    %v93 = vunpack.c.l.b16 %v85
    %v94 = vunpack.c.l.b16 %v86
    %v95 = vunpack.c.l.b16 %v87
    %v96 = vpack.c.b16 %v93, %v92
    %v97 = vpack.c.b16 %v95, %v94
    %vm98 = vcmask 261120
    %v100 = vsel %vm98, %v96, 0
    %v103 = vsel %vm98, %v97, 0
    %105 = vmatprep.subr.bf16.mxu0 0
    %106 = vmatpush1.bf16.msra.mxu0 %v82
    %107 = vmatprep.subr.bf16.mxu0 0
    %108 = vmatpush1.bf16.msra.mxu0 %v83
    %109 = vmatprep.subr.bf16.mxu0 0
    %110 = vmatpush1.bf16.msra.mxu0 0
    %111 = vmatprep.subr.bf16.mxu0 0
    %112 = vmatpush1.bf16.msra.mxu0 0
    %113 = vmatprep.subr.bf16.mxu0 0
    %114 = vmatpush1.bf16.msra.mxu0 0
    %115 = vmatprep.subr.bf16.mxu0 0
    %116 = vmatpush1.bf16.msra.mxu0 0
    %117 = vmatprep.subr.bf16.mxu0 0
    %118 = vmatpush1.bf16.msra.mxu0 0
    %119 = vmatprep.subr.bf16.mxu0 0
    %120 = vmatpush1.bf16.msra.mxu0 0
    %121 = vmatprep.subr.bf16.mxu0 0
    %122 = vmatpush1.bf16.msra.mxu0 0
    %123 = vmatprep.subr.bf16.mxu0 0
    %124 = vmatpush1.bf16.msra.mxu0 0
    %125 = vmatprep.subr.bf16.mxu0 0
    %126 = vmatpush1.bf16.msra.mxu0 0
    %127 = vmatprep.subr.bf16.mxu0 0
    %128 = vmatpush1.bf16.msra.mxu0 0
    %129 = vmatprep.subr.bf16.mxu0 0
    %130 = vmatpush1.bf16.msra.mxu0 0
    %131 = vmatprep.subr.bf16.mxu0 0
    %132 = vmatpush1.bf16.msra.mxu0 0
    %133 = vmatprep.subr.bf16.mxu0 0
    %134 = vmatpush1.bf16.msra.mxu0 0
    %135 = vmatprep.subr.bf16.mxu0 0
    %136 = vmatpush1.bf16.msra.mxu0 0
    %137 = vmatprep.mubr.bf16.mxu0 0
    %138 = vmatmul.mubr.bf16.gmra.mrb[0].mxu0 %v100
    %v139 = vpop.f32.mrb[0].mxu0
    %v140 = vadd.f32 0.0, %v139
    %v141 = vpop.f32.mrb[0].mxu0
    %v142 = vpop.f32.mrb[0].mxu0
    %v143 = vadd.f32 0.0, %v142
    %v144 = vpop.f32.mrb[0].mxu0
    %145 = vmatprep.mubr.bf16.mxu0 0
    %146 = vmatmul.mubr.bf16.gmra.mrb[0].mxu0 %v103
    %v147 = vpop.f32.mrb[0].mxu0
    %v148 = vadd.f32 0.0, %v147
    %v149 = vpop.f32.mrb[0].mxu0
    %v150 = vpop.f32.mrb[0].mxu0
    %v151 = vadd.f32 0.0, %v150
    %v152 = vpop.f32.mrb[0].mxu0
    %153 = vdwg.mxu0
    %v154 = vpack.c.bf16 %v143, %v140
    %v155 = vpack.c.bf16 %v151, %v148
    %v156 = vld [vmem:[#allocation7] sm:$0xf]
    %v157 = vld [vmem:[#allocation7 + $0x4] sm:$0xf]
    %v158 = vld [vmem:[#allocation7 + $0x8] sm:$0xf]
    %v159 = vld [vmem:[#allocation7 + $0xc] sm:$0xf]
    %v160 = vld [vmem:[#allocation7 + $0x10] sm:$0xf]
    %v161 = vld [vmem:[#allocation7 + $0x14] sm:$0xf]
    %v162 = vld [vmem:[#allocation7 + $0x18] sm:$0xf]
    %v163 = vld [vmem:[#allocation7 + $0x1c] sm:$0xf]
    %v164 = vld [vmem:[#allocation7 + $0x20] sm:$0xf]
    %v165 = vld [vmem:[#allocation7 + $0x24] sm:$0xf]
    %v166 = vld [vmem:[#allocation7 + $0x28] sm:$0xf]
    %v167 = vld [vmem:[#allocation7 + $0x2c] sm:$0xf]
    %v168 = vld [vmem:[#allocation7 + $0x30] sm:$0xf]
    %v169 = vld [vmem:[#allocation7 + $0x34] sm:$0xf]
    %v170 = vld [vmem:[#allocation7 + $0x38] sm:$0xf]
    %v171 = vld [vmem:[#allocation7 + $0x3c] sm:$0xf]
    %s172 = scalar_lea.vmem [#allocation7], 64
    %v173 = vld [vmem:[%s172] sm:$0xf]
    %v174 = vld [vmem:[%s172 + $0x4] sm:$0xf]
    %v175 = vld [vmem:[%s172 + $0x8] sm:$0xf]
    %v176 = vld [vmem:[%s172 + $0xc] sm:$0xf]
    %v177 = vld [vmem:[%s172 + $0x10] sm:$0xf]
    %v178 = vld [vmem:[%s172 + $0x14] sm:$0xf]
    %v179 = vld [vmem:[%s172 + $0x18] sm:$0xf]
    %v180 = vld [vmem:[%s172 + $0x1c] sm:$0xf]
    %v181 = vld [vmem:[%s172 + $0x20] sm:$0xf]
    %v182 = vld [vmem:[%s172 + $0x24] sm:$0xf]
    %v183 = vld [vmem:[%s172 + $0x28] sm:$0xf]
    %v184 = vld [vmem:[%s172 + $0x2c] sm:$0xf]
    %v185 = vld [vmem:[%s172 + $0x30] sm:$0xf]
    %v186 = vld [vmem:[%s172 + $0x34] sm:$0xf]
    %v187 = vld [vmem:[%s172 + $0x38] sm:$0xf]
    %v188 = vld [vmem:[%s172 + $0x3c] sm:$0xf]
    %v205 = vunpack.c.l.b16 %v173
    %v206 = vunpack.c.l.b16 %v174
    %v207 = vunpack.c.l.b16 %v175
    %v208 = vunpack.c.l.b16 %v176
    %v209 = vunpack.c.l.b16 %v177
    %v210 = vunpack.c.l.b16 %v178
    %v211 = vunpack.c.l.b16 %v179
    %v212 = vunpack.c.l.b16 %v180
    %v213 = vunpack.c.l.b16 %v181
    %v214 = vunpack.c.l.b16 %v182
    %v215 = vunpack.c.l.b16 %v183
    %v216 = vunpack.c.l.b16 %v184
    %v217 = vunpack.c.l.b16 %v185
    %v218 = vunpack.c.l.b16 %v186
    %v219 = vunpack.c.l.b16 %v187
    %v220 = vunpack.c.l.b16 %v188
    %v221 = vpack.c.b16 %v206, %v205
    %v222 = vpack.c.b16 %v208, %v207
    %v223 = vpack.c.b16 %v210, %v209
    %v224 = vpack.c.b16 %v212, %v211
    %v225 = vpack.c.b16 %v214, %v213
    %v226 = vpack.c.b16 %v216, %v215
    %v227 = vpack.c.b16 %v218, %v217
    %v228 = vpack.c.b16 %v220, %v219
    %237 = vmatprep.subr.bf16.mxu0 0
    %238 = vmatpush1.bf16.msra.mxu0 %v221
    %239 = vmatprep.subr.bf16.mxu0 0
    %240 = vmatpush1.bf16.msra.mxu0 %v222
    %241 = vmatprep.subr.bf16.mxu0 0
    %242 = vmatpush1.bf16.msra.mxu0 %v223
    %243 = vmatprep.subr.bf16.mxu0 0
    %244 = vmatpush1.bf16.msra.mxu0 %v224
    %245 = vmatprep.subr.bf16.mxu0 0
    %246 = vmatpush1.bf16.msra.mxu0 %v225
    %247 = vmatprep.subr.bf16.mxu0 0
    %248 = vmatpush1.bf16.msra.mxu0 %v226
    %249 = vmatprep.subr.bf16.mxu0 0
    %250 = vmatpush1.bf16.msra.mxu0 %v227
    %251 = vmatprep.subr.bf16.mxu0 0
    %252 = vmatpush1.bf16.msra.mxu0 %v228
    %253 = vmatprep.subr.bf16.mxu0 0
    %254 = vmatpush1.bf16.msra.mxu0 0
    %255 = vmatprep.subr.bf16.mxu0 0
    %256 = vmatpush1.bf16.msra.mxu0 0
    %257 = vmatprep.subr.bf16.mxu0 0
    %258 = vmatpush1.bf16.msra.mxu0 0
    %259 = vmatprep.subr.bf16.mxu0 0
    %260 = vmatpush1.bf16.msra.mxu0 0
    %261 = vmatprep.subr.bf16.mxu0 0
    %262 = vmatpush1.bf16.msra.mxu0 0
    %263 = vmatprep.subr.bf16.mxu0 0
    %264 = vmatpush1.bf16.msra.mxu0 0
    %265 = vmatprep.subr.bf16.mxu0 0
    %266 = vmatpush1.bf16.msra.mxu0 0
    %267 = vmatprep.subr.bf16.mxu0 0
    %268 = vmatpush1.bf16.msra.mxu0 0
    %269 = vmatprep.mubr.bf16.mxu0 0
    %270 = vmatmul.mubr.bf16.gmra.mrb[0].mxu0 %v82
    %v271 = vpop.f32.mrb[0].mxu0
    %v272 = vadd.f32 0.0, %v271
    %v273 = vpop.f32.mrb[0].mxu0
    %v274 = vpop.f32.mrb[0].mxu0
    %v275 = vadd.f32 0.0, %v274
    %v276 = vpop.f32.mrb[0].mxu0
    %277 = vmatprep.mubr.bf16.mxu0 0
    %278 = vmatmul.mubr.bf16.gmra.mrb[0].mxu0 %v83
    %v279 = vpop.f32.mrb[0].mxu0
    %v280 = vadd.f32 0.0, %v279
    %v281 = vpop.f32.mrb[0].mxu0
    %v282 = vpop.f32.mrb[0].mxu0
    %v283 = vadd.f32 0.0, %v282
    %v284 = vpop.f32.mrb[0].mxu0
    %285 = vdwg.mxu0
    %v302 = vunpack.c.l.b16 %v156
    %v303 = vunpack.c.l.b16 %v157
    %v304 = vunpack.c.l.b16 %v158
    %v305 = vunpack.c.l.b16 %v159
    %v306 = vunpack.c.l.b16 %v160
    %v307 = vunpack.c.l.b16 %v161
    %v308 = vunpack.c.l.b16 %v162
    %v309 = vunpack.c.l.b16 %v163
    %v310 = vunpack.c.l.b16 %v164
    %v311 = vunpack.c.l.b16 %v165
    %v312 = vunpack.c.l.b16 %v166
    %v313 = vunpack.c.l.b16 %v167
    %v314 = vunpack.c.l.b16 %v168
    %v315 = vunpack.c.l.b16 %v169
    %v316 = vunpack.c.l.b16 %v170
    %v317 = vunpack.c.l.b16 %v171
    %v318 = vpack.c.b16 %v303, %v302
    %v319 = vpack.c.b16 %v305, %v304
    %v320 = vpack.c.b16 %v307, %v306
    %v321 = vpack.c.b16 %v309, %v308
    %v322 = vpack.c.b16 %v311, %v310
    %v323 = vpack.c.b16 %v313, %v312
    %v324 = vpack.c.b16 %v315, %v314
    %v325 = vpack.c.b16 %v317, %v316
    %334 = vmatprep.subr.bf16.mxu0 0
    %335 = vmatpush1.bf16.msra.mxu0 %v318
    %336 = vmatprep.subr.bf16.mxu0 0
    %337 = vmatpush1.bf16.msra.mxu0 %v319
    %338 = vmatprep.subr.bf16.mxu0 0
    %339 = vmatpush1.bf16.msra.mxu0 %v320
    %340 = vmatprep.subr.bf16.mxu0 0
    %341 = vmatpush1.bf16.msra.mxu0 %v321
    %342 = vmatprep.subr.bf16.mxu0 0
    %343 = vmatpush1.bf16.msra.mxu0 %v322
    %344 = vmatprep.subr.bf16.mxu0 0
    %345 = vmatpush1.bf16.msra.mxu0 %v323
    %346 = vmatprep.subr.bf16.mxu0 0
    %347 = vmatpush1.bf16.msra.mxu0 %v324
    %348 = vmatprep.subr.bf16.mxu0 0
    %349 = vmatpush1.bf16.msra.mxu0 %v325
    %350 = vmatprep.subr.bf16.mxu0 0
    %351 = vmatpush1.bf16.msra.mxu0 0
    %352 = vmatprep.subr.bf16.mxu0 0
    %353 = vmatpush1.bf16.msra.mxu0 0
    %354 = vmatprep.subr.bf16.mxu0 0
    %355 = vmatpush1.bf16.msra.mxu0 0
    %356 = vmatprep.subr.bf16.mxu0 0
    %357 = vmatpush1.bf16.msra.mxu0 0
    %358 = vmatprep.subr.bf16.mxu0 0
    %359 = vmatpush1.bf16.msra.mxu0 0
    %360 = vmatprep.subr.bf16.mxu0 0
    %361 = vmatpush1.bf16.msra.mxu0 0
    %362 = vmatprep.subr.bf16.mxu0 0
    %363 = vmatpush1.bf16.msra.mxu0 0
    %364 = vmatprep.subr.bf16.mxu0 0
    %365 = vmatpush1.bf16.msra.mxu0 0
    %366 = vmatprep.mubr.bf16.mxu0 0
    %367 = vmatmul.mubr.bf16.gmra.mrb[0].mxu0 %v154
    %v368 = vpop.f32.mrb[0].mxu0
    %v369 = vadd.f32 %v272, %v368
    %v370 = vpop.f32.mrb[0].mxu0
    %v371 = vpop.f32.mrb[0].mxu0
    %v372 = vadd.f32 %v275, %v371
    %v373 = vpop.f32.mrb[0].mxu0
    %374 = vmatprep.mubr.bf16.mxu0 0
    %375 = vmatmul.mubr.bf16.gmra.mrb[0].mxu0 %v155
    %v376 = vpop.f32.mrb[0].mxu0
    %v377 = vadd.f32 %v280, %v376
    %v378 = vpop.f32.mrb[0].mxu0
    %v379 = vpop.f32.mrb[0].mxu0
    %v380 = vadd.f32 %v283, %v379
    %v381 = vpop.f32.mrb[0].mxu0
    %382 = vdwg.mxu0
    %s383 = scalar_lea.vmem [#allocation5], 32
    %v384 = vld [vmem:[%s383] sm:$0xf]
    %v385 = vld [vmem:[%s383 + $0x4] sm:$0xf]
    %v386 = vld [vmem:[%s383 + $0x8] sm:$0xf]
    %v387 = vld [vmem:[%s383 + $0xc] sm:$0xf]
    %v392 = vunpack.c.l.b16 %v384
    %v393 = vunpack.c.l.b16 %v385
    %v394 = vunpack.c.l.b16 %v386
    %v395 = vunpack.c.l.b16 %v387
    %v396 = vpack.c.b16 %v393, %v392
    %v397 = vpack.c.b16 %v395, %v394
    %v399 = vsel %vm98, %v396, 0
    %v402 = vsel %vm98, %v397, 0
    %404 = vmatprep.subr.bf16.mxu0 0
    %405 = vmatpush1.bf16.msra.mxu0 %v82
    %406 = vmatprep.subr.bf16.mxu0 0
    %407 = vmatpush1.bf16.msra.mxu0 %v83
    %408 = vmatprep.subr.bf16.mxu0 0
    %409 = vmatpush1.bf16.msra.mxu0 0
    %410 = vmatprep.subr.bf16.mxu0 0
    %411 = vmatpush1.bf16.msra.mxu0 0
    %412 = vmatprep.subr.bf16.mxu0 0
    %413 = vmatpush1.bf16.msra.mxu0 0
    %414 = vmatprep.subr.bf16.mxu0 0
    %415 = vmatpush1.bf16.msra.mxu0 0
    %416 = vmatprep.subr.bf16.mxu0 0
    %417 = vmatpush1.bf16.msra.mxu0 0
    %418 = vmatprep.subr.bf16.mxu0 0
    %419 = vmatpush1.bf16.msra.mxu0 0
    %420 = vmatprep.subr.bf16.mxu0 0
    %421 = vmatpush1.bf16.msra.mxu0 0
    %422 = vmatprep.subr.bf16.mxu0 0
    %423 = vmatpush1.bf16.msra.mxu0 0
    %424 = vmatprep.subr.bf16.mxu0 0
    %425 = vmatpush1.bf16.msra.mxu0 0
    %426 = vmatprep.subr.bf16.mxu0 0
    %427 = vmatpush1.bf16.msra.mxu0 0
    %428 = vmatprep.subr.bf16.mxu0 0
    %429 = vmatpush1.bf16.msra.mxu0 0
    %430 = vmatprep.subr.bf16.mxu0 0
    %431 = vmatpush1.bf16.msra.mxu0 0
    %432 = vmatprep.subr.bf16.mxu0 0
    %433 = vmatpush1.bf16.msra.mxu0 0
    %434 = vmatprep.subr.bf16.mxu0 0
    %435 = vmatpush1.bf16.msra.mxu0 0
    %436 = vmatprep.mubr.bf16.mxu0 0
    %437 = vmatmul.mubr.bf16.gmra.mrb[0].mxu0 %v399
    %v438 = vpop.f32.mrb[0].mxu0
    %v439 = vadd.f32 0.0, %v438
    %v440 = vpop.f32.mrb[0].mxu0
    %v441 = vpop.f32.mrb[0].mxu0
    %v442 = vadd.f32 0.0, %v441
    %v443 = vpop.f32.mrb[0].mxu0
    %444 = vmatprep.mubr.bf16.mxu0 0
    %445 = vmatmul.mubr.bf16.gmra.mrb[0].mxu0 %v402
    %v446 = vpop.f32.mrb[0].mxu0
    %v447 = vadd.f32 0.0, %v446
    %v448 = vpop.f32.mrb[0].mxu0
    %v449 = vpop.f32.mrb[0].mxu0
    %v450 = vadd.f32 0.0, %v449
    %v451 = vpop.f32.mrb[0].mxu0
    %452 = vdwg.mxu0
    %v453 = vpack.c.bf16 %v442, %v439
    %v454 = vpack.c.bf16 %v450, %v447
    %s455 = scalar_lea.vmem [#allocation7], 128
    %v456 = vld [vmem:[%s455] sm:$0xf]
    %v457 = vld [vmem:[%s455 + $0x4] sm:$0xf]
    %v458 = vld [vmem:[%s455 + $0x8] sm:$0xf]
    %v459 = vld [vmem:[%s455 + $0xc] sm:$0xf]
    %v460 = vld [vmem:[%s455 + $0x10] sm:$0xf]
    %v461 = vld [vmem:[%s455 + $0x14] sm:$0xf]
    %v462 = vld [vmem:[%s455 + $0x18] sm:$0xf]
    %v463 = vld [vmem:[%s455 + $0x1c] sm:$0xf]
    %v464 = vld [vmem:[%s455 + $0x20] sm:$0xf]
    %v465 = vld [vmem:[%s455 + $0x24] sm:$0xf]
    %v466 = vld [vmem:[%s455 + $0x28] sm:$0xf]
    %v467 = vld [vmem:[%s455 + $0x2c] sm:$0xf]
    %v468 = vld [vmem:[%s455 + $0x30] sm:$0xf]
    %v469 = vld [vmem:[%s455 + $0x34] sm:$0xf]
    %v470 = vld [vmem:[%s455 + $0x38] sm:$0xf]
    %v471 = vld [vmem:[%s455 + $0x3c] sm:$0xf]
    %v488 = vunpack.c.l.b16 %v456
    %v489 = vunpack.c.l.b16 %v457
    %v490 = vunpack.c.l.b16 %v458
    %v491 = vunpack.c.l.b16 %v459
    %v492 = vunpack.c.l.b16 %v460
    %v493 = vunpack.c.l.b16 %v461
    %v494 = vunpack.c.l.b16 %v462
    %v495 = vunpack.c.l.b16 %v463
    %v496 = vunpack.c.l.b16 %v464
    %v497 = vunpack.c.l.b16 %v465
    %v498 = vunpack.c.l.b16 %v466
    %v499 = vunpack.c.l.b16 %v467
    %v500 = vunpack.c.l.b16 %v468
    %v501 = vunpack.c.l.b16 %v469
    %v502 = vunpack.c.l.b16 %v470
    %v503 = vunpack.c.l.b16 %v471
    %v504 = vpack.c.b16 %v489, %v488
    %v505 = vpack.c.b16 %v491, %v490
    %v506 = vpack.c.b16 %v493, %v492
    %v507 = vpack.c.b16 %v495, %v494
    %v508 = vpack.c.b16 %v497, %v496
    %v509 = vpack.c.b16 %v499, %v498
    %v510 = vpack.c.b16 %v501, %v500
    %v511 = vpack.c.b16 %v503, %v502
    %520 = vmatprep.subr.bf16.mxu0 0
    %521 = vmatpush1.bf16.msra.mxu0 %v504
    %522 = vmatprep.subr.bf16.mxu0 0
    %523 = vmatpush1.bf16.msra.mxu0 %v505
    %524 = vmatprep.subr.bf16.mxu0 0
    %525 = vmatpush1.bf16.msra.mxu0 %v506
    %526 = vmatprep.subr.bf16.mxu0 0
    %527 = vmatpush1.bf16.msra.mxu0 %v507
    %528 = vmatprep.subr.bf16.mxu0 0
    %529 = vmatpush1.bf16.msra.mxu0 %v508
    %530 = vmatprep.subr.bf16.mxu0 0
    %531 = vmatpush1.bf16.msra.mxu0 %v509
    %532 = vmatprep.subr.bf16.mxu0 0
    %533 = vmatpush1.bf16.msra.mxu0 %v510
    %534 = vmatprep.subr.bf16.mxu0 0
    %535 = vmatpush1.bf16.msra.mxu0 %v511
    %536 = vmatprep.subr.bf16.mxu0 0
    %537 = vmatpush1.bf16.msra.mxu0 0
    %538 = vmatprep.subr.bf16.mxu0 0
    %539 = vmatpush1.bf16.msra.mxu0 0
    %540 = vmatprep.subr.bf16.mxu0 0
    %541 = vmatpush1.bf16.msra.mxu0 0
    %542 = vmatprep.subr.bf16.mxu0 0
    %543 = vmatpush1.bf16.msra.mxu0 0
    %544 = vmatprep.subr.bf16.mxu0 0
    %545 = vmatpush1.bf16.msra.mxu0 0
    %546 = vmatprep.subr.bf16.mxu0 0
    %547 = vmatpush1.bf16.msra.mxu0 0
    %548 = vmatprep.subr.bf16.mxu0 0
    %549 = vmatpush1.bf16.msra.mxu0 0
    %550 = vmatprep.subr.bf16.mxu0 0
    %551 = vmatpush1.bf16.msra.mxu0 0
    %552 = vmatprep.mubr.bf16.mxu0 0
    %553 = vmatmul.mubr.bf16.gmra.mrb[0].mxu0 %v453
    %v554 = vpop.f32.mrb[0].mxu0
    %v555 = vadd.f32 0.0, %v554
    %v556 = vpop.f32.mrb[0].mxu0
    %v557 = vpop.f32.mrb[0].mxu0
    %v558 = vadd.f32 0.0, %v557
    %v559 = vpop.f32.mrb[0].mxu0
    %560 = vmatprep.mubr.bf16.mxu0 0
    %561 = vmatmul.mubr.bf16.gmra.mrb[0].mxu0 %v454
    %v562 = vpop.f32.mrb[0].mxu0
    %v563 = vadd.f32 0.0, %v562
    %v564 = vpop.f32.mrb[0].mxu0
    %v565 = vpop.f32.mrb[0].mxu0
    %v566 = vadd.f32 0.0, %v565
    %v567 = vpop.f32.mrb[0].mxu0
    %568 = vdwg.mxu0
    %v569 = vadd.f32 %v369, %v555
    %v570 = vadd.f32 %v372, %v558
    %v571 = vadd.f32 %v377, %v563
    %v572 = vadd.f32 %v380, %v566
    %v573 = vlaneseq
    %v574 = vshrl.u32 %v573, 7
    %v575 = vsub.s32 0, %v574
    %v576 = vrot.slane %v81, %v575
    %v577 = vadd.f32 %v569, %v576
    %v578 = vadd.f32 %v570, %v576
    %v579 = vadd.f32 %v571, %v576
    %v580 = vadd.f32 %v572, %v576
    %v581 = vmax.f32 %v577, 0.0
    %v582 = vmax.f32 %v578, 0.0
    %v583 = vmax.f32 %v579, 0.0
    %v584 = vmax.f32 %v580, 0.0
    %v585 = vpack.c.bf16 %v582, %v581
    %v586 = vpack.c.bf16 %v584, %v583
    %587 = vmatprep.subr.bf16.mxu0 0
    %588 = vmatpush1.bf16.msra.mxu0 %v585
    %589 = vmatprep.subr.bf16.mxu0 0
    %590 = vmatpush1.bf16.msra.mxu0 %v586
    %591 = vmatprep.subr.bf16.mxu0 0
    %592 = vmatpush1.bf16.msra.mxu0 0
    %593 = vmatprep.subr.bf16.mxu0 0
    %594 = vmatpush1.bf16.msra.mxu0 0
    %595 = vmatprep.subr.bf16.mxu0 0
    %596 = vmatpush1.bf16.msra.mxu0 0
    %597 = vmatprep.subr.bf16.mxu0 0
    %598 = vmatpush1.bf16.msra.mxu0 0
    %599 = vmatprep.subr.bf16.mxu0 0
    %600 = vmatpush1.bf16.msra.mxu0 0
    %601 = vmatprep.subr.bf16.mxu0 0
    %602 = vmatpush1.bf16.msra.mxu0 0
    %603 = vmatprep.subr.bf16.mxu0 0
    %604 = vmatpush1.bf16.msra.mxu0 0
    %605 = vmatprep.subr.bf16.mxu0 0
    %606 = vmatpush1.bf16.msra.mxu0 0
    %607 = vmatprep.subr.bf16.mxu0 0
    %608 = vmatpush1.bf16.msra.mxu0 0
    %609 = vmatprep.subr.bf16.mxu0 0
    %610 = vmatpush1.bf16.msra.mxu0 0
    %611 = vmatprep.subr.bf16.mxu0 0
    %612 = vmatpush1.bf16.msra.mxu0 0
    %613 = vmatprep.subr.bf16.mxu0 0
    %614 = vmatpush1.bf16.msra.mxu0 0
    %615 = vmatprep.subr.bf16.mxu0 0
    %616 = vmatpush1.bf16.msra.mxu0 0
    %617 = vmatprep.subr.bf16.mxu0 0
    %618 = vmatpush1.bf16.msra.mxu0 0
    %619 = vmatprep.mubr.bf16.mxu0 0
    %620 = vmatmul.mubr.bf16.gmra.mrb[0].mxu0 %v100
    %v621 = vpop.f32.mrb[0].mxu0
    %v622 = vadd.f32 0.0, %v621
    %v623 = vpop.f32.mrb[0].mxu0
    %v624 = vpop.f32.mrb[0].mxu0
    %v625 = vadd.f32 0.0, %v624
    %v626 = vpop.f32.mrb[0].mxu0
    %627 = vmatprep.mubr.bf16.mxu0 0
    %628 = vmatmul.mubr.bf16.gmra.mrb[0].mxu0 %v103
    %v629 = vpop.f32.mrb[0].mxu0
    %v630 = vadd.f32 0.0, %v629
    %v631 = vpop.f32.mrb[0].mxu0
    %v632 = vpop.f32.mrb[0].mxu0
    %v633 = vadd.f32 0.0, %v632
    %v634 = vpop.f32.mrb[0].mxu0
    %635 = vdwg.mxu0
    %v636 = vpack.c.bf16 %v625, %v622
    %v637 = vpack.c.bf16 %v633, %v630
    %v638 = vld [vmem:[#allocation8] sm:$0xf]
    %v639 = vld [vmem:[#allocation8 + $0x4] sm:$0xf]
    %v640 = vld [vmem:[#allocation8 + $0x8] sm:$0xf]
    %v641 = vld [vmem:[#allocation8 + $0xc] sm:$0xf]
    %v642 = vld [vmem:[#allocation8 + $0x10] sm:$0xf]
    %v643 = vld [vmem:[#allocation8 + $0x14] sm:$0xf]
    %v644 = vld [vmem:[#allocation8 + $0x18] sm:$0xf]
    %v645 = vld [vmem:[#allocation8 + $0x1c] sm:$0xf]
    %v646 = vld [vmem:[#allocation8 + $0x20] sm:$0xf]
    %v647 = vld [vmem:[#allocation8 + $0x24] sm:$0xf]
    %v648 = vld [vmem:[#allocation8 + $0x28] sm:$0xf]
    %v649 = vld [vmem:[#allocation8 + $0x2c] sm:$0xf]
    %v650 = vld [vmem:[#allocation8 + $0x30] sm:$0xf]
    %v651 = vld [vmem:[#allocation8 + $0x34] sm:$0xf]
    %v652 = vld [vmem:[#allocation8 + $0x38] sm:$0xf]
    %v653 = vld [vmem:[#allocation8 + $0x3c] sm:$0xf]
    %s654 = scalar_lea.vmem [#allocation8], 64
    %v655 = vld [vmem:[%s654] sm:$0xf]
    %v656 = vld [vmem:[%s654 + $0x4] sm:$0xf]
    %v657 = vld [vmem:[%s654 + $0x8] sm:$0xf]
    %v658 = vld [vmem:[%s654 + $0xc] sm:$0xf]
    %v659 = vld [vmem:[%s654 + $0x10] sm:$0xf]
    %v660 = vld [vmem:[%s654 + $0x14] sm:$0xf]
    %v661 = vld [vmem:[%s654 + $0x18] sm:$0xf]
    %v662 = vld [vmem:[%s654 + $0x1c] sm:$0xf]
    %v663 = vld [vmem:[%s654 + $0x20] sm:$0xf]
    %v664 = vld [vmem:[%s654 + $0x24] sm:$0xf]
    %v665 = vld [vmem:[%s654 + $0x28] sm:$0xf]
    %v666 = vld [vmem:[%s654 + $0x2c] sm:$0xf]
    %v667 = vld [vmem:[%s654 + $0x30] sm:$0xf]
    %v668 = vld [vmem:[%s654 + $0x34] sm:$0xf]
    %v669 = vld [vmem:[%s654 + $0x38] sm:$0xf]
    %v670 = vld [vmem:[%s654 + $0x3c] sm:$0xf]
    %v687 = vunpack.c.l.b16 %v655
    %v688 = vunpack.c.l.b16 %v656
    %v689 = vunpack.c.l.b16 %v657
    %v690 = vunpack.c.l.b16 %v658
    %v691 = vunpack.c.l.b16 %v659
    %v692 = vunpack.c.l.b16 %v660
    %v693 = vunpack.c.l.b16 %v661
    %v694 = vunpack.c.l.b16 %v662
    %v695 = vunpack.c.l.b16 %v663
    %v696 = vunpack.c.l.b16 %v664
    %v697 = vunpack.c.l.b16 %v665
    %v698 = vunpack.c.l.b16 %v666
    %v699 = vunpack.c.l.b16 %v667
    %v700 = vunpack.c.l.b16 %v668
    %v701 = vunpack.c.l.b16 %v669
    %v702 = vunpack.c.l.b16 %v670
    %v703 = vpack.c.b16 %v688, %v687
    %v704 = vpack.c.b16 %v690, %v689
    %v705 = vpack.c.b16 %v692, %v691
    %v706 = vpack.c.b16 %v694, %v693
    %v707 = vpack.c.b16 %v696, %v695
    %v708 = vpack.c.b16 %v698, %v697
    %v709 = vpack.c.b16 %v700, %v699
    %v710 = vpack.c.b16 %v702, %v701
    %719 = vmatprep.subr.bf16.mxu0 0
    %720 = vmatpush1.bf16.msra.mxu0 %v703
    %721 = vmatprep.subr.bf16.mxu0 0
    %722 = vmatpush1.bf16.msra.mxu0 %v704
    %723 = vmatprep.subr.bf16.mxu0 0
    %724 = vmatpush1.bf16.msra.mxu0 %v705
    %725 = vmatprep.subr.bf16.mxu0 0
    %726 = vmatpush1.bf16.msra.mxu0 %v706
    %727 = vmatprep.subr.bf16.mxu0 0
    %728 = vmatpush1.bf16.msra.mxu0 %v707
    %729 = vmatprep.subr.bf16.mxu0 0
    %730 = vmatpush1.bf16.msra.mxu0 %v708
    %731 = vmatprep.subr.bf16.mxu0 0
    %732 = vmatpush1.bf16.msra.mxu0 %v709
    %733 = vmatprep.subr.bf16.mxu0 0
    %734 = vmatpush1.bf16.msra.mxu0 %v710
    %735 = vmatprep.subr.bf16.mxu0 0
    %736 = vmatpush1.bf16.msra.mxu0 0
    %737 = vmatprep.subr.bf16.mxu0 0
    %738 = vmatpush1.bf16.msra.mxu0 0
    %739 = vmatprep.subr.bf16.mxu0 0
    %740 = vmatpush1.bf16.msra.mxu0 0
    %741 = vmatprep.subr.bf16.mxu0 0
    %742 = vmatpush1.bf16.msra.mxu0 0
    %743 = vmatprep.subr.bf16.mxu0 0
    %744 = vmatpush1.bf16.msra.mxu0 0
    %745 = vmatprep.subr.bf16.mxu0 0
    %746 = vmatpush1.bf16.msra.mxu0 0
    %747 = vmatprep.subr.bf16.mxu0 0
    %748 = vmatpush1.bf16.msra.mxu0 0
    %749 = vmatprep.subr.bf16.mxu0 0
    %750 = vmatpush1.bf16.msra.mxu0 0
    %751 = vmatprep.mubr.bf16.mxu0 0
    %752 = vmatmul.mubr.bf16.gmra.mrb[0].mxu0 %v585
    %v753 = vpop.f32.mrb[0].mxu0
    %v754 = vadd.f32 0.0, %v753
    %v755 = vpop.f32.mrb[0].mxu0
    %v756 = vpop.f32.mrb[0].mxu0
    %v757 = vadd.f32 0.0, %v756
    %v758 = vpop.f32.mrb[0].mxu0
    %759 = vmatprep.mubr.bf16.mxu0 0
    %760 = vmatmul.mubr.bf16.gmra.mrb[0].mxu0 %v586
    %v761 = vpop.f32.mrb[0].mxu0
    %v762 = vadd.f32 0.0, %v761
    %v763 = vpop.f32.mrb[0].mxu0
    %v764 = vpop.f32.mrb[0].mxu0
    %v765 = vadd.f32 0.0, %v764
    %v766 = vpop.f32.mrb[0].mxu0
    %767 = vdwg.mxu0
    %v784 = vunpack.c.l.b16 %v638
    %v785 = vunpack.c.l.b16 %v639
    %v786 = vunpack.c.l.b16 %v640
    %v787 = vunpack.c.l.b16 %v641
    %v788 = vunpack.c.l.b16 %v642
    %v789 = vunpack.c.l.b16 %v643
    %v790 = vunpack.c.l.b16 %v644
    %v791 = vunpack.c.l.b16 %v645
    %v792 = vunpack.c.l.b16 %v646
    %v793 = vunpack.c.l.b16 %v647
    %v794 = vunpack.c.l.b16 %v648
    %v795 = vunpack.c.l.b16 %v649
    %v796 = vunpack.c.l.b16 %v650
    %v797 = vunpack.c.l.b16 %v651
    %v798 = vunpack.c.l.b16 %v652
    %v799 = vunpack.c.l.b16 %v653
    %v800 = vpack.c.b16 %v785, %v784
    %v801 = vpack.c.b16 %v787, %v786
    %v802 = vpack.c.b16 %v789, %v788
    %v803 = vpack.c.b16 %v791, %v790
    %v804 = vpack.c.b16 %v793, %v792
    %v805 = vpack.c.b16 %v795, %v794
    %v806 = vpack.c.b16 %v797, %v796
    %v807 = vpack.c.b16 %v799, %v798
    %816 = vmatprep.subr.bf16.mxu0 0
    %817 = vmatpush1.bf16.msra.mxu0 %v800
    %818 = vmatprep.subr.bf16.mxu0 0
    %819 = vmatpush1.bf16.msra.mxu0 %v801
    %820 = vmatprep.subr.bf16.mxu0 0
    %821 = vmatpush1.bf16.msra.mxu0 %v802
    %822 = vmatprep.subr.bf16.mxu0 0
    %823 = vmatpush1.bf16.msra.mxu0 %v803
    %824 = vmatprep.subr.bf16.mxu0 0
    %825 = vmatpush1.bf16.msra.mxu0 %v804
    %826 = vmatprep.subr.bf16.mxu0 0
    %827 = vmatpush1.bf16.msra.mxu0 %v805
    %828 = vmatprep.subr.bf16.mxu0 0
    %829 = vmatpush1.bf16.msra.mxu0 %v806
    %830 = vmatprep.subr.bf16.mxu0 0
    %831 = vmatpush1.bf16.msra.mxu0 %v807
    %832 = vmatprep.subr.bf16.mxu0 0
    %833 = vmatpush1.bf16.msra.mxu0 0
    %834 = vmatprep.subr.bf16.mxu0 0
    %835 = vmatpush1.bf16.msra.mxu0 0
    %836 = vmatprep.subr.bf16.mxu0 0
    %837 = vmatpush1.bf16.msra.mxu0 0
    %838 = vmatprep.subr.bf16.mxu0 0
    %839 = vmatpush1.bf16.msra.mxu0 0
    %840 = vmatprep.subr.bf16.mxu0 0
    %841 = vmatpush1.bf16.msra.mxu0 0
    %842 = vmatprep.subr.bf16.mxu0 0
    %843 = vmatpush1.bf16.msra.mxu0 0
    %844 = vmatprep.subr.bf16.mxu0 0
    %845 = vmatpush1.bf16.msra.mxu0 0
    %846 = vmatprep.subr.bf16.mxu0 0
    %847 = vmatpush1.bf16.msra.mxu0 0
    %848 = vmatprep.mubr.bf16.mxu0 0
    %849 = vmatmul.mubr.bf16.gmra.mrb[0].mxu0 %v636
    %v850 = vpop.f32.mrb[0].mxu0
    %v851 = vadd.f32 %v754, %v850
    %v852 = vpop.f32.mrb[0].mxu0
    %v853 = vpop.f32.mrb[0].mxu0
    %v854 = vadd.f32 %v757, %v853
    %v855 = vpop.f32.mrb[0].mxu0
    %856 = vmatprep.mubr.bf16.mxu0 0
    %857 = vmatmul.mubr.bf16.gmra.mrb[0].mxu0 %v637
    %v858 = vpop.f32.mrb[0].mxu0
    %v859 = vadd.f32 %v762, %v858
    %v860 = vpop.f32.mrb[0].mxu0
    %v861 = vpop.f32.mrb[0].mxu0
    %v862 = vadd.f32 %v765, %v861
    %v863 = vpop.f32.mrb[0].mxu0
    %864 = vdwg.mxu0
    %865 = vmatprep.subr.bf16.mxu0 0
    %866 = vmatpush1.bf16.msra.mxu0 %v585
    %867 = vmatprep.subr.bf16.mxu0 0
    %868 = vmatpush1.bf16.msra.mxu0 %v586
    %869 = vmatprep.subr.bf16.mxu0 0
    %870 = vmatpush1.bf16.msra.mxu0 0
    %871 = vmatprep.subr.bf16.mxu0 0
    %872 = vmatpush1.bf16.msra.mxu0 0
    %873 = vmatprep.subr.bf16.mxu0 0
    %874 = vmatpush1.bf16.msra.mxu0 0
    %875 = vmatprep.subr.bf16.mxu0 0
    %876 = vmatpush1.bf16.msra.mxu0 0
    %877 = vmatprep.subr.bf16.mxu0 0
    %878 = vmatpush1.bf16.msra.mxu0 0
    %879 = vmatprep.subr.bf16.mxu0 0
    %880 = vmatpush1.bf16.msra.mxu0 0
    %881 = vmatprep.subr.bf16.mxu0 0
    %882 = vmatpush1.bf16.msra.mxu0 0
    %883 = vmatprep.subr.bf16.mxu0 0
    %884 = vmatpush1.bf16.msra.mxu0 0
    %885 = vmatprep.subr.bf16.mxu0 0
    %886 = vmatpush1.bf16.msra.mxu0 0
    %887 = vmatprep.subr.bf16.mxu0 0
    %888 = vmatpush1.bf16.msra.mxu0 0
    %889 = vmatprep.subr.bf16.mxu0 0
    %890 = vmatpush1.bf16.msra.mxu0 0
    %891 = vmatprep.subr.bf16.mxu0 0
    %892 = vmatpush1.bf16.msra.mxu0 0
    %893 = vmatprep.subr.bf16.mxu0 0
    %894 = vmatpush1.bf16.msra.mxu0 0
    %895 = vmatprep.subr.bf16.mxu0 0
    %896 = vmatpush1.bf16.msra.mxu0 0
    %897 = vmatprep.mubr.bf16.mxu0 0
    %898 = vmatmul.mubr.bf16.gmra.mrb[0].mxu0 %v399
    %v899 = vpop.f32.mrb[0].mxu0
    %v900 = vadd.f32 0.0, %v899
    %v901 = vpop.f32.mrb[0].mxu0
    %v902 = vpop.f32.mrb[0].mxu0
    %v903 = vadd.f32 0.0, %v902
    %v904 = vpop.f32.mrb[0].mxu0
    %905 = vmatprep.mubr.bf16.mxu0 0
    %906 = vmatmul.mubr.bf16.gmra.mrb[0].mxu0 %v402
    %v907 = vpop.f32.mrb[0].mxu0
    %v908 = vadd.f32 0.0, %v907
    %v909 = vpop.f32.mrb[0].mxu0
    %v910 = vpop.f32.mrb[0].mxu0
    %v911 = vadd.f32 0.0, %v910
    %v912 = vpop.f32.mrb[0].mxu0
    %913 = vdwg.mxu0
    %v914 = vpack.c.bf16 %v903, %v900
    %v915 = vpack.c.bf16 %v911, %v908
    %s916 = scalar_lea.vmem [#allocation8], 128
    %v917 = vld [vmem:[%s916] sm:$0xf]
    %v918 = vld [vmem:[%s916 + $0x4] sm:$0xf]
    %v919 = vld [vmem:[%s916 + $0x8] sm:$0xf]
    %v920 = vld [vmem:[%s916 + $0xc] sm:$0xf]
    %v921 = vld [vmem:[%s916 + $0x10] sm:$0xf]
    %v922 = vld [vmem:[%s916 + $0x14] sm:$0xf]
    %v923 = vld [vmem:[%s916 + $0x18] sm:$0xf]
    %v924 = vld [vmem:[%s916 + $0x1c] sm:$0xf]
    %v925 = vld [vmem:[%s916 + $0x20] sm:$0xf]
    %v926 = vld [vmem:[%s916 + $0x24] sm:$0xf]
    %v927 = vld [vmem:[%s916 + $0x28] sm:$0xf]
    %v928 = vld [vmem:[%s916 + $0x2c] sm:$0xf]
    %v929 = vld [vmem:[%s916 + $0x30] sm:$0xf]
    %v930 = vld [vmem:[%s916 + $0x34] sm:$0xf]
    %v931 = vld [vmem:[%s916 + $0x38] sm:$0xf]
    %v932 = vld [vmem:[%s916 + $0x3c] sm:$0xf]
    %v949 = vunpack.c.l.b16 %v917
    %v950 = vunpack.c.l.b16 %v918
    %v951 = vunpack.c.l.b16 %v919
    %v952 = vunpack.c.l.b16 %v920
    %v953 = vunpack.c.l.b16 %v921
    %v954 = vunpack.c.l.b16 %v922
    %v955 = vunpack.c.l.b16 %v923
    %v956 = vunpack.c.l.b16 %v924
    %v957 = vunpack.c.l.b16 %v925
    %v958 = vunpack.c.l.b16 %v926
    %v959 = vunpack.c.l.b16 %v927
    %v960 = vunpack.c.l.b16 %v928
    %v961 = vunpack.c.l.b16 %v929
    %v962 = vunpack.c.l.b16 %v930
    %v963 = vunpack.c.l.b16 %v931
    %v964 = vunpack.c.l.b16 %v932
    %v965 = vpack.c.b16 %v950, %v949
    %v966 = vpack.c.b16 %v952, %v951
    %v967 = vpack.c.b16 %v954, %v953
    %v968 = vpack.c.b16 %v956, %v955
    %v969 = vpack.c.b16 %v958, %v957
    %v970 = vpack.c.b16 %v960, %v959
    %v971 = vpack.c.b16 %v962, %v961
    %v972 = vpack.c.b16 %v964, %v963
    %981 = vmatprep.subr.bf16.mxu0 0
    %982 = vmatpush1.bf16.msra.mxu0 %v965
    %983 = vmatprep.subr.bf16.mxu0 0
    %984 = vmatpush1.bf16.msra.mxu0 %v966
    %985 = vmatprep.subr.bf16.mxu0 0
    %986 = vmatpush1.bf16.msra.mxu0 %v967
    %987 = vmatprep.subr.bf16.mxu0 0
    %988 = vmatpush1.bf16.msra.mxu0 %v968
    %989 = vmatprep.subr.bf16.mxu0 0
    %990 = vmatpush1.bf16.msra.mxu0 %v969
    %991 = vmatprep.subr.bf16.mxu0 0
    %992 = vmatpush1.bf16.msra.mxu0 %v970
    %993 = vmatprep.subr.bf16.mxu0 0
    %994 = vmatpush1.bf16.msra.mxu0 %v971
    %995 = vmatprep.subr.bf16.mxu0 0
    %996 = vmatpush1.bf16.msra.mxu0 %v972
    %997 = vmatprep.subr.bf16.mxu0 0
    %998 = vmatpush1.bf16.msra.mxu0 0
    %999 = vmatprep.subr.bf16.mxu0 0
    %1000 = vmatpush1.bf16.msra.mxu0 0
    %1001 = vmatprep.subr.bf16.mxu0 0
    %1002 = vmatpush1.bf16.msra.mxu0 0
    %1003 = vmatprep.subr.bf16.mxu0 0
    %1004 = vmatpush1.bf16.msra.mxu0 0
    %1005 = vmatprep.subr.bf16.mxu0 0
    %1006 = vmatpush1.bf16.msra.mxu0 0
    %1007 = vmatprep.subr.bf16.mxu0 0
    %1008 = vmatpush1.bf16.msra.mxu0 0
    %1009 = vmatprep.subr.bf16.mxu0 0
    %1010 = vmatpush1.bf16.msra.mxu0 0
    %1011 = vmatprep.subr.bf16.mxu0 0
    %1012 = vmatpush1.bf16.msra.mxu0 0
    %1013 = vmatprep.mubr.bf16.mxu0 0
    %1014 = vmatmul.mubr.bf16.gmra.mrb[0].mxu0 %v914
    %v1015 = vpop.f32.mrb[0].mxu0
    %v1016 = vadd.f32 0.0, %v1015
    %v1017 = vpop.f32.mrb[0].mxu0
    %v1018 = vpop.f32.mrb[0].mxu0
    %v1019 = vadd.f32 0.0, %v1018
    %v1020 = vpop.f32.mrb[0].mxu0
    %1021 = vmatprep.mubr.bf16.mxu0 0
    %1022 = vmatmul.mubr.bf16.gmra.mrb[0].mxu0 %v915
    %v1023 = vpop.f32.mrb[0].mxu0
    %v1024 = vadd.f32 0.0, %v1023
    %v1025 = vpop.f32.mrb[0].mxu0
    %v1026 = vpop.f32.mrb[0].mxu0
    %v1027 = vadd.f32 0.0, %v1026
    %v1028 = vpop.f32.mrb[0].mxu0
    %1029 = vdwg.mxu0
    %v1030 = vadd.f32 %v851, %v1016
    %v1031 = vadd.f32 %v854, %v1019
    %v1032 = vadd.f32 %v859, %v1024
    %v1033 = vadd.f32 %v862, %v1027
    %v1034 = vlaneseq
    %v1035 = vshrl.u32 %v1034, 7
    %v1036 = vsub.s32 1, %v1035
    %v1037 = vrot.slane %v81, %v1036
    %v1038 = vadd.f32 %v1030, %v1037
    %v1039 = vadd.f32 %v1031, %v1037
    %v1040 = vadd.f32 %v1032, %v1037
    %v1041 = vadd.f32 %v1033, %v1037
    %v1042 = vmax.f32 %v1038, 0.0
    %v1043 = vmax.f32 %v1039, 0.0
    %v1044 = vmax.f32 %v1040, 0.0
    %v1045 = vmax.f32 %v1041, 0.0
    %v1046 = vadd.f32 %v77, %v1042
    %v1047 = vadd.f32 %v78, %v1043
    %v1048 = vadd.f32 %v79, %v1044
    %v1049 = vadd.f32 %v80, %v1045
    %v1050 = vmax.f32 %v1046, 0.0
    %v1051 = vmax.f32 %v1047, 0.0
    %v1052 = vmax.f32 %v1048, 0.0
    %v1053 = vmax.f32 %v1049, 0.0
    %1054 = vst [vmem:[#allocation10] sm:$0xff] %v1050
    %1055 = vst [vmem:[#allocation10 + $0x8] sm:$0xff] %v1051
    %1056 = vst [vmem:[#allocation10 + $0x10] sm:$0xff] %v1052
    %1057 = vst [vmem:[#allocation10 + $0x18] sm:$0xff] %v1053
    // Predicated region
    $region38: #{tpu_custom_call.1} parent=1 // pred_check
      _
    $region39: #{tpu_custom_call.1} parent=1 // pred_check_branch
      %1059 = sbr.rel (0) target = $region41
    $region40: #{tpu_custom_call.1} parent=1 // pred_region
      %s1061 = ssub.s32 512, 512
      %1062 = vsyncadd [#allocation4], %s1061
      %s1063 = sshll.u32 [#allocation10], 4
      %s1064 = int_to_ptr.vmem [resolvable:$true] %s1063
      %1069 = dma.vmem_to_hbm [thread:$0]  %s1064, 512, %s5, [#allocation4], 128, 128, 8
    $region41: #{tpu_custom_call.1} parent=1 // pred_fallthru
      _
    // Predicated region
    $region42: #{tpu_custom_call.1} parent=1 // pred_check
      _
    $region43: #{tpu_custom_call.1} parent=1 // pred_check_branch
      %1071 = sbr.rel (0) target = $region45
    $region44: #{tpu_custom_call.1} parent=1 // pred_region
      %1072 = dma.done [#allocation4], 512
    $region45: #{tpu_custom_call.1} parent=1 // pred_fallthru
      _
    %1073 = vsyncpa [#allocation3], 1
    %1074 = vsyncpa [#allocation6], 1
    %1075 = vsyncpa [#allocation9], 1
    %1076 = vsyncpa [#allocation4], 1

</llo_original>
